<compile_context>
chip_gen: v5e
topology: v5e:2x2
jax: 0.10.0
libtpu: 0.0.40
codegen_flags: <defaults>
</compile_context>

<pallas_src>
import numpy as np
import jax
import jax.numpy as jnp
from jax.experimental import pallas as pl
from jax.experimental.pallas import tpu as pltpu


def _round_up(x, m):
    return ((x + m - 1) // m) * m


# ----------------------------------------------------------------------------
# Pallas kernel: processes B_TILE batch elements per grid step, all in (BT, L*E).
# ----------------------------------------------------------------------------
def precursor_encoder_kernel(seq_ref, pz_ref, w1e_ref, b1e_ref,
                             bigw_ref, bigb_ref, outw_ref, outb_ref, o_ref):
    # seq_ref: (BT, L*E) f32 sequence embedding, flat index l*E + e.   pz_ref: (BT, C) f32.
    # w1e/bigw/outw: bf16 MXU operands.  Biases f32.
    n_blocks = bigw_ref.shape[0]

    # pz_embed (pz_linear_2 folded into pz_linear_1): one MXU matmul + f32 bias add.
    h = jnp.dot(pz_ref[...].astype(jnp.bfloat16), w1e_ref[...],
                preferred_element_type=jnp.float32) + b1e_ref[...]          # (BT, L*E) f32
    x = seq_ref[...] * h                                                    # f32 VPU

    # resnet blocks: each dilated conv (+ folded BN) is one dense (L*E, L*E) bf16 matmul.
    for blk in range(n_blocks):
        residual = x
        hcur = x
        for c in range(2):
            y = jnp.dot(hcur.astype(jnp.bfloat16), bigw_ref[blk, c],
                        preferred_element_type=jnp.float32) + bigb_ref[blk, c]
            hcur = jnp.maximum(y, 0.0) if c == 0 else y    # ReLU after first conv/BN only
        x = jnp.maximum(hcur + residual, 0.0)              # residual add + ReLU (f32 VPU)

    # dropout: identity (inference).  outw was pre-permuted from PyTorch's (e*L + l)
    # flatten order and lane-padded -> full lane-dense store.
    o_ref[...] = jnp.dot(x.astype(jnp.bfloat16), outw_ref[...],
                         preferred_element_type=jnp.float32) + outb_ref[...]


# ----------------------------------------------------------------------------
# One-time weight preprocessing (pure parameter plumbing, no per-sample compute).
# ----------------------------------------------------------------------------
def prepare_kernel_params(params, lane=128):
    emb = params['emb'].astype(jnp.float32)
    w1, b1 = params['w1'], params['b1']                # (C, L), (1, L)
    w2, b2 = params['w2'], params['b2']                # (1, E), (1, E)
    convw, convb = params['convw'], params['convb']    # (nb, 2, K, E, E), (nb, 2, 1, E)
    outw, outb = params['outw'], params['outb']        # (E*L, O), (1, O)

    E = emb.shape[1]
    C, L = w1.shape
    nb, _, K, _, _ = convw.shape
    O = outw.shape[1]
    LE = L * E

    # pz_linear_1 replicated across channels; pz_linear_2 folded in at prep time.
    w1e = jnp.repeat(w1, E, axis=1)                    # (C, L*E): column l*E+e -> w1[:, l]
    b1e = jnp.repeat(b1, E, axis=1)                    # (1, L*E)
    w2e = jnp.tile(w2, (1, L))                         # (1, L*E): column l*E+e -> w2[e]
    b2e = jnp.tile(b2, (1, L))                         # (1, L*E)
    w1e_folded = (w1e * w2e).astype(jnp.bfloat16)      # MXU operand -> bf16
    b1e_folded = (b1e * w2e + b2e).astype(jnp.float32) # bias stays f32

    # Dilated 'same' Conv1d as a dense (L*E, L*E) matmul:
    # bigw[blk,c][lp*E+ei, l*E+eo] = sum_t [lp == l + (t-K//2)*(blk+1)] * convw[blk,c,t,ei,eo]
    shift = np.zeros((nb, K, L, L), np.float32)
    for blk in range(nb):
        dil = blk + 1
        for t in range(K):
            off = (t - K // 2) * dil
            for l in range(L):
                lp = l + off
                if 0 <= lp < L:
                    shift[blk, t, l, lp] = 1.0
    bigw = jnp.einsum('ntlp,nctio->ncpilo', jnp.asarray(shift), convw)
    bigw = bigw.reshape(nb, 2, LE, LE).astype(jnp.bfloat16)   # MXU operand -> bf16
    bigb = jnp.tile(convb, (1, 1, 1, L)).astype(jnp.float32)  # (nb, 2, 1, L*E) f32 bias

    # Output Linear: permute rows from PyTorch flatten order e*L+l to kernel order l*E+e,
    # and pad the output dim to a lane-dense multiple of 128.
    o_pad = _round_up(O, lane)
    outw_perm = outw.reshape(E, L, O).transpose(1, 0, 2).reshape(LE, O)
    outw_pad = jnp.zeros((LE, o_pad), jnp.float32).at[:, :O].set(outw_perm)
    outw_pad = outw_pad.astype(jnp.bfloat16)                  # MXU operand -> bf16
    outb_pad = jnp.zeros((1, o_pad), jnp.float32).at[:, :O].set(outb)

    return dict(emb=emb, w1e=w1e_folded, b1e=b1e_folded,
                bigw=bigw, bigb=bigb, outw_pad=outw_pad, outb_pad=outb_pad,
                out_dim=O)


# ----------------------------------------------------------------------------
# Wrapper: embedding gather + batch padding in JAX, hot path in Pallas.
# ----------------------------------------------------------------------------
def precursor_encoder_forward(seq, pz, kp, b_tile=None):
    B, L = seq.shape
    C = pz.shape[1]
    LE = kp['w1e'].shape[1]
    o_pad = kp['outw_pad'].shape[1]
    O = kp['out_dim']

    if b_tile is None:
        # Large batch tile so per-step compute >> ~0.35us grid overhead; multiple of 16
        # (bf16 sublane packing).  For B >= 256 keep >= 2 grid tiles so v7x's two
        # TensorCores both get work ("parallel" axis shards across cores).
        cap = 1024
        if B >= 256:
            n_target = max(2, pl.cdiv(B, cap))
            b_tile = _round_up(pl.cdiv(B, n_target), 16)
        else:
            b_tile = _round_up(max(B, 8), 16)
    n_tiles = pl.cdiv(B, b_tile)
    b_pad = n_tiles * b_tile
    if b_pad != B:
        seq = jnp.concatenate([seq, jnp.zeros((b_pad - B, L), seq.dtype)], axis=0)
        pz = jnp.concatenate([pz, jnp.zeros((b_pad - B, C), pz.dtype)], axis=0)

    # Embedding gather + flatten to the kernel's channels-flat (l*E + e) layout.
    # TODO(synk): the gather could move in-kernel (SMEM seq + VMEM-resident table) to
    # save one HBM round trip at small B; skipped as low-priority plumbing.
    seq_flat = jnp.take(kp['emb'], seq, axis=0).reshape(b_pad, LE)
    pz_f = pz.astype(jnp.float32)

    def full(a):
        nd = a.ndim
        return pl.BlockSpec(a.shape, lambda i, nd=nd: (0,) * nd)

    out = pl.pallas_call(
        precursor_encoder_kernel,
        out_shape=jax.ShapeDtypeStruct((b_pad, o_pad), jnp.float32),
        grid=(n_tiles,),
        in_specs=[
            pl.BlockSpec((b_tile, LE), lambda i: (i, 0)),   # seq embedding, per batch tile
            pl.BlockSpec((b_tile, C), lambda i: (i, 0)),    # pz, per batch tile
            full(kp['w1e']), full(kp['b1e']),
            full(kp['bigw']), full(kp['bigb']),
            full(kp['outw_pad']), full(kp['outb_pad']),
        ],
        out_specs=pl.BlockSpec((b_tile, o_pad), lambda i: (i, 0)),
        compiler_params=pltpu.CompilerParams(
            dimension_semantics=("parallel",),
            vmem_limit_bytes=32 * 1024 * 1024,   # headroom for large b_tile sweeps (v5e default is 16 MiB)
        ),
    )(seq_flat, pz_f, kp['w1e'], kp['b1e'],
      kp['bigw'], kp['bigb'], kp['outw_pad'], kp['outb_pad'])
    return out[:B, :O]


# ----------------------------------------------------------------------------
# Pure-JAX f32 reference (raw, unfolded parameters) for the correctness check.
# ----------------------------------------------------------------------------
def reference_forward(seq, pz, params):
    emb = params['emb'][seq]                                          # (B, L, E)
    h = pz @ params['w1'] + params['b1']                              # (B, L)
    pz_emb = h[..., None] * params['w2'][0] + params['b2'][0]         # (B, L, E)
    x = emb * pz_emb
    nb, _, K, E, _ = params['convw'].shape
    L = x.shape[1]
    for blk in range(nb):
        d = blk + 1
        residual = x
        hh = x
        for c in range(2):
            acc = jnp.zeros_like(x)
            for t in range(K):
                off = (t - K // 2) * d
                xs = jnp.zeros_like(hh)
                lo, hi = max(0, -off), min(L, L - off)
                if hi > lo:
                    xs = xs.at[:, lo:hi, :].set(hh[:, lo + off:hi + off, :])
                acc = acc + xs @ params['convw'][blk, c, t]
            y = acc + params['convb'][blk, c]
            hh = jnp.maximum(y, 0.0) if c == 0 else y
        x = jnp.maximum(hh + residual, 0.0)
    B = x.shape[0]
    flat = jnp.transpose(x, (0, 2, 1)).reshape(B, -1)                 # PyTorch flatten order
    return flat @ params['outw'] + params['outb']


def make_params(vec_length, n_states, n_charges, embed_dim, output_dim, n_blocks, kernel):
    L, E, C, O, K = vec_length, embed_dim, n_charges, output_dim, kernel
    keys = jax.random.split(jax.random.PRNGKey(0), 9)

    emb = 0.1 * jax.random.normal(keys[0], (n_states, E), jnp.float32)
    emb = emb.at[0].set(0.0)                                          # padding_idx=0

    w1 = jax.random.normal(keys[1], (C, L), jnp.float32) / np.sqrt(C)  # Linear(C->L)
    b1 = 0.1 * jax.random.normal(keys[2], (1, L), jnp.float32)
    w2 = jax.random.normal(keys[3], (1, E), jnp.float32)               # Linear(1->E)
    b2 = 0.1 * jax.random.normal(keys[4], (1, E), jnp.float32)

    convw = jax.random.normal(keys[5], (n_blocks, 2, K, E, E), jnp.float32) / np.sqrt(E * K)
    convb = 0.1 * jax.random.normal(keys[6], (n_blocks, 2, 1, E), jnp.float32)
    # Fold eval-mode BatchNorm (default stats: mean=0, var=1, gamma=1, beta=0) into the conv.
    bn_scale = np.float32(1.0 / np.sqrt(1.0 + 1e-5))
    convw = convw * bn_scale
    convb = convb * bn_scale

    outw = jax.random.normal(keys[7], (E * L, O), jnp.float32) / np.sqrt(E * L)
    outb = 0.1 * jax.random.normal(keys[8], (1, O), jnp.float32)

    return dict(emb=emb, w1=w1, b1=b1, w2=w2, b2=b2,
                convw=convw, convb=convb, outw=outw, outb=outb)


if __name__ == "__main__":
    # Small, module-consistent shapes.
    B = 2
    vec_length = 8      # L (sequence length)
    n_states = 24
    n_charges = 4
    embed_dim = 32      # E
    output_dim = 16     # O
    n_blocks = 2
    kernel = 3

    params = make_params(vec_length, n_states, n_charges, embed_dim,
                         output_dim, n_blocks, kernel)
    kparams = prepare_kernel_params(params)

    kin = jax.random.split(jax.random.PRNGKey(0), 2)
    seq = jax.random.randint(kin[0], (B, vec_length), 0, n_states, dtype=jnp.int32)
    pz = jax.random.normal(kin[1], (B, n_charges), jnp.float32)

    out = precursor_encoder_forward(seq, pz, kparams)
    out = jax.block_until_ready(out)

    ref = reference_forward(seq, pz, params)
    assert out.shape == (B, output_dim)
    # bf16 MXU operands with f32 accumulation: tolerance loosened vs the pure-f32 reference.
    assert jnp.allclose(out, ref, atol=2e-2, rtol=5e-2), "kernel mismatch vs reference"

    print("KERNEL_OK")
</pallas_src>

<mosaic_0001>
module attributes {stable_mosaic.version = 11 : i64} {
  func.func @precursor_encoder_kernel(%arg0: i32, %arg1: memref<16x256xf32, #tpu.memory_space<vmem>>, %arg2: memref<16x4xf32, #tpu.memory_space<vmem>>, %arg3: memref<4x256xbf16, #tpu.memory_space<vmem>>, %arg4: memref<1x256xf32, #tpu.memory_space<vmem>>, %arg5: memref<2x2x256x256xbf16, #tpu.memory_space<vmem>>, %arg6: memref<2x2x1x256xf32, #tpu.memory_space<vmem>>, %arg7: memref<256x128xbf16, #tpu.memory_space<vmem>>, %arg8: memref<1x128xf32, #tpu.memory_space<vmem>>, %arg9: memref<16x128xf32, #tpu.memory_space<vmem>>) attributes {dimension_semantics = [#tpu.dimension_semantics<parallel>], iteration_bounds = array<i64: 1>, scalar_prefetch = 0 : i64, scratch_operands = 0 : i64, tpu.core_type = #tpu.core_type<tc>, window_params = [{transform_indices = @transform_0, window_bounds = array<i64: 16, 256>}, {transform_indices = @transform_1, window_bounds = array<i64: 16, 4>}, {pipeline_mode = #tpu.pipeline_mode<synchronous>, transform_indices = @transform_2, window_bounds = array<i64: 4, 256>}, {pipeline_mode = #tpu.pipeline_mode<synchronous>, transform_indices = @transform_3, window_bounds = array<i64: 1, 256>}, {pipeline_mode = #tpu.pipeline_mode<synchronous>, transform_indices = @transform_4, window_bounds = array<i64: 2, 2, 256, 256>}, {pipeline_mode = #tpu.pipeline_mode<synchronous>, transform_indices = @transform_5, window_bounds = array<i64: 2, 2, 1, 256>}, {pipeline_mode = #tpu.pipeline_mode<synchronous>, transform_indices = @transform_6, window_bounds = array<i64: 256, 128>}, {pipeline_mode = #tpu.pipeline_mode<synchronous>, transform_indices = @transform_7, window_bounds = array<i64: 1, 128>}, {transform_indices = @transform_8, window_bounds = array<i64: 16, 128>}]} {
    %c0 = arith.constant 0 : index
    %c0_0 = arith.constant 0 : index
    %0 = vector.load %arg2[%c0, %c0_0] : memref<16x4xf32, #tpu.memory_space<vmem>>, vector<16x4xf32>
    %1 = arith.truncf %0 : vector<16x4xf32> to vector<16x4xbf16>
    %c0_1 = arith.constant 0 : index
    %c0_2 = arith.constant 0 : index
    %2 = vector.load %arg3[%c0_1, %c0_2] : memref<4x256xbf16, #tpu.memory_space<vmem>>, vector<4x256xbf16>
    %cst = arith.constant dense<0.000000e+00> : vector<16x256xf32>
    %3 = tpu.matmul %1, %2, %cst {dimension_numbers = #tpu.dot_dimension_numbers<[1], [0], [0], [1], [0, 0, 1, 1], [], []>} : vector<16x4xbf16>, vector<4x256xbf16>, vector<16x256xf32> -> vector<16x256xf32>
    %c0_3 = arith.constant 0 : index
    %c0_4 = arith.constant 0 : index
    %4 = vector.load %arg4[%c0_3, %c0_4] : memref<1x256xf32, #tpu.memory_space<vmem>>, vector<1x256xf32>
    %5 = vector.broadcast %4 : vector<1x256xf32> to vector<16x256xf32>
    %6 = arith.addf %3, %5 : vector<16x256xf32>
    %c0_5 = arith.constant 0 : index
    %c0_6 = arith.constant 0 : index
    %7 = vector.load %arg1[%c0_5, %c0_6] : memref<16x256xf32, #tpu.memory_space<vmem>>, vector<16x256xf32>
    %8 = arith.mulf %7, %6 : vector<16x256xf32>
    %9 = arith.truncf %8 : vector<16x256xf32> to vector<16x256xbf16>
    %c0_7 = arith.constant 0 : index
    %c0_8 = arith.constant 0 : index
    %c0_9 = arith.constant 0 : index
    %c0_10 = arith.constant 0 : index
    %10 = vector.load %arg5[%c0_7, %c0_8, %c0_9, %c0_10] : memref<2x2x256x256xbf16, #tpu.memory_space<vmem>>, vector<1x1x256x256xbf16>
    %11 = vector.shape_cast %10 : vector<1x1x256x256xbf16> to vector<256x256xbf16>
    %cst_11 = arith.constant dense<0.000000e+00> : vector<16x256xf32>
    %12 = tpu.matmul %9, %11, %cst_11 {dimension_numbers = #tpu.dot_dimension_numbers<[1], [0], [0], [1], [0, 0, 1, 1], [], []>} : vector<16x256xbf16>, vector<256x256xbf16>, vector<16x256xf32> -> vector<16x256xf32>
    %c0_12 = arith.constant 0 : index
    %c0_13 = arith.constant 0 : index
    %c0_14 = arith.constant 0 : index
    %c0_15 = arith.constant 0 : index
    %13 = vector.load %arg6[%c0_12, %c0_13, %c0_14, %c0_15] : memref<2x2x1x256xf32, #tpu.memory_space<vmem>>, vector<1x1x1x256xf32>
    %14 = vector.shape_cast %13 : vector<1x1x1x256xf32> to vector<1x256xf32>
    %15 = vector.broadcast %14 : vector<1x256xf32> to vector<16x256xf32>
    %16 = arith.addf %12, %15 : vector<16x256xf32>
    %cst_16 = arith.constant 0.000000e+00 : f32
    %17 = vector.broadcast %cst_16 : f32 to vector<16x256xf32>
    %18 = arith.maximumf %16, %17 : vector<16x256xf32>
    %19 = arith.truncf %18 : vector<16x256xf32> to vector<16x256xbf16>
    %c0_17 = arith.constant 0 : index
    %c1 = arith.constant 1 : index
    %c0_18 = arith.constant 0 : index
    %c0_19 = arith.constant 0 : index
    %20 = vector.load %arg5[%c0_17, %c1, %c0_18, %c0_19] : memref<2x2x256x256xbf16, #tpu.memory_space<vmem>>, vector<1x1x256x256xbf16>
    %21 = vector.shape_cast %20 : vector<1x1x256x256xbf16> to vector<256x256xbf16>
    %cst_20 = arith.constant dense<0.000000e+00> : vector<16x256xf32>
    %22 = tpu.matmul %19, %21, %cst_20 {dimension_numbers = #tpu.dot_dimension_numbers<[1], [0], [0], [1], [0, 0, 1, 1], [], []>} : vector<16x256xbf16>, vector<256x256xbf16>, vector<16x256xf32> -> vector<16x256xf32>
    %c0_21 = arith.constant 0 : index
    %c1_22 = arith.constant 1 : index
    %c0_23 = arith.constant 0 : index
    %c0_24 = arith.constant 0 : index
    %23 = vector.load %arg6[%c0_21, %c1_22, %c0_23, %c0_24] : memref<2x2x1x256xf32, #tpu.memory_space<vmem>>, vector<1x1x1x256xf32>
    %24 = vector.shape_cast %23 : vector<1x1x1x256xf32> to vector<1x256xf32>
    %25 = vector.broadcast %24 : vector<1x256xf32> to vector<16x256xf32>
    %26 = arith.addf %22, %25 : vector<16x256xf32>
    %27 = arith.addf %26, %8 : vector<16x256xf32>
    %cst_25 = arith.constant 0.000000e+00 : f32
    %28 = vector.broadcast %cst_25 : f32 to vector<16x256xf32>
    %29 = arith.maximumf %27, %28 : vector<16x256xf32>
    %30 = arith.truncf %29 : vector<16x256xf32> to vector<16x256xbf16>
    %c1_26 = arith.constant 1 : index
    %c0_27 = arith.constant 0 : index
    %c0_28 = arith.constant 0 : index
    %c0_29 = arith.constant 0 : index
    %31 = vector.load %arg5[%c1_26, %c0_27, %c0_28, %c0_29] : memref<2x2x256x256xbf16, #tpu.memory_space<vmem>>, vector<1x1x256x256xbf16>
    %32 = vector.shape_cast %31 : vector<1x1x256x256xbf16> to vector<256x256xbf16>
    %cst_30 = arith.constant dense<0.000000e+00> : vector<16x256xf32>
    %33 = tpu.matmul %30, %32, %cst_30 {dimension_numbers = #tpu.dot_dimension_numbers<[1], [0], [0], [1], [0, 0, 1, 1], [], []>} : vector<16x256xbf16>, vector<256x256xbf16>, vector<16x256xf32> -> vector<16x256xf32>
    %c1_31 = arith.constant 1 : index
    %c0_32 = arith.constant 0 : index
    %c0_33 = arith.constant 0 : index
    %c0_34 = arith.constant 0 : index
    %34 = vector.load %arg6[%c1_31, %c0_32, %c0_33, %c0_34] : memref<2x2x1x256xf32, #tpu.memory_space<vmem>>, vector<1x1x1x256xf32>
    %35 = vector.shape_cast %34 : vector<1x1x1x256xf32> to vector<1x256xf32>
    %36 = vector.broadcast %35 : vector<1x256xf32> to vector<16x256xf32>
    %37 = arith.addf %33, %36 : vector<16x256xf32>
    %cst_35 = arith.constant 0.000000e+00 : f32
    %38 = vector.broadcast %cst_35 : f32 to vector<16x256xf32>
    %39 = arith.maximumf %37, %38 : vector<16x256xf32>
    %40 = arith.truncf %39 : vector<16x256xf32> to vector<16x256xbf16>
    %c1_36 = arith.constant 1 : index
    %c1_37 = arith.constant 1 : index
    %c0_38 = arith.constant 0 : index
    %c0_39 = arith.constant 0 : index
    %41 = vector.load %arg5[%c1_36, %c1_37, %c0_38, %c0_39] : memref<2x2x256x256xbf16, #tpu.memory_space<vmem>>, vector<1x1x256x256xbf16>
    %42 = vector.shape_cast %41 : vector<1x1x256x256xbf16> to vector<256x256xbf16>
    %cst_40 = arith.constant dense<0.000000e+00> : vector<16x256xf32>
    %43 = tpu.matmul %40, %42, %cst_40 {dimension_numbers = #tpu.dot_dimension_numbers<[1], [0], [0], [1], [0, 0, 1, 1], [], []>} : vector<16x256xbf16>, vector<256x256xbf16>, vector<16x256xf32> -> vector<16x256xf32>
    %c1_41 = arith.constant 1 : index
    %c1_42 = arith.constant 1 : index
    %c0_43 = arith.constant 0 : index
    %c0_44 = arith.constant 0 : index
    %44 = vector.load %arg6[%c1_41, %c1_42, %c0_43, %c0_44] : memref<2x2x1x256xf32, #tpu.memory_space<vmem>>, vector<1x1x1x256xf32>
    %45 = vector.shape_cast %44 : vector<1x1x1x256xf32> to vector<1x256xf32>
    %46 = vector.broadcast %45 : vector<1x256xf32> to vector<16x256xf32>
    %47 = arith.addf %43, %46 : vector<16x256xf32>
    %48 = arith.addf %47, %29 : vector<16x256xf32>
    %cst_45 = arith.constant 0.000000e+00 : f32
    %49 = vector.broadcast %cst_45 : f32 to vector<16x256xf32>
    %50 = arith.maximumf %48, %49 : vector<16x256xf32>
    %51 = arith.truncf %50 : vector<16x256xf32> to vector<16x256xbf16>
    %c0_46 = arith.constant 0 : index
    %c0_47 = arith.constant 0 : index
    %52 = vector.load %arg7[%c0_46, %c0_47] : memref<256x128xbf16, #tpu.memory_space<vmem>>, vector<256x128xbf16>
    %cst_48 = arith.constant dense<0.000000e+00> : vector<16x128xf32>
    %53 = tpu.matmul %51, %52, %cst_48 {dimension_numbers = #tpu.dot_dimension_numbers<[1], [0], [0], [1], [0, 0, 1, 1], [], []>} : vector<16x256xbf16>, vector<256x128xbf16>, vector<16x128xf32> -> vector<16x128xf32>
    %c0_49 = arith.constant 0 : index
    %c0_50 = arith.constant 0 : index
    %54 = vector.load %arg8[%c0_49, %c0_50] : memref<1x128xf32, #tpu.memory_space<vmem>>, vector<1x128xf32>
    %55 = vector.broadcast %54 : vector<1x128xf32> to vector<16x128xf32>
    %56 = arith.addf %53, %55 : vector<16x128xf32>
    %c0_51 = arith.constant 0 : index
    %c0_52 = arith.constant 0 : index
    %57 = vector.load %arg9[%c0_51, %c0_52] : memref<16x128xf32, #tpu.memory_space<vmem>>, vector<16x128xf32>
    tpu.vector_store %arg9[%c0_51, %c0_52], %56 {strides = array<i32>} : memref<16x128xf32, #tpu.memory_space<vmem>>, vector<16x128xf32>,
    return
  }
  func.func @transform_0(%arg0: i32) -> (i32, i32) {
    %c0_i32 = arith.constant 0 : i32
    %c0_i32_0 = arith.constant 0 : i32
    return %arg0, %c0_i32 : i32, i32
  }
  func.func @transform_1(%arg0: i32) -> (i32, i32) {
    %c0_i32 = arith.constant 0 : i32
    %c0_i32_0 = arith.constant 0 : i32
    return %arg0, %c0_i32 : i32, i32
  }
  func.func @transform_2(%arg0: i32) -> (i32, i32) {
    %c0_i32 = arith.constant 0 : i32
    %c0_i32_0 = arith.constant 0 : i32
    %c0_i32_1 = arith.constant 0 : i32
    return %c0_i32, %c0_i32_0 : i32, i32
  }
  func.func @transform_3(%arg0: i32) -> (i32, i32) {
    %c0_i32 = arith.constant 0 : i32
    %c0_i32_0 = arith.constant 0 : i32
    %c0_i32_1 = arith.constant 0 : i32
    return %c0_i32, %c0_i32_0 : i32, i32
  }
  func.func @transform_4(%arg0: i32) -> (i32, i32, i32, i32) {
    %c0_i32 = arith.constant 0 : i32
    %c0_i32_0 = arith.constant 0 : i32
    %c0_i32_1 = arith.constant 0 : i32
    %c0_i32_2 = arith.constant 0 : i32
    %c0_i32_3 = arith.constant 0 : i32
    return %c0_i32, %c0_i32_0, %c0_i32_1, %c0_i32_2 : i32, i32, i32, i32
  }
  func.func @transform_5(%arg0: i32) -> (i32, i32, i32, i32) {
    %c0_i32 = arith.constant 0 : i32
    %c0_i32_0 = arith.constant 0 : i32
    %c0_i32_1 = arith.constant 0 : i32
    %c0_i32_2 = arith.constant 0 : i32
    %c0_i32_3 = arith.constant 0 : i32
    return %c0_i32, %c0_i32_0, %c0_i32_1, %c0_i32_2 : i32, i32, i32, i32
  }
  func.func @transform_6(%arg0: i32) -> (i32, i32) {
    %c0_i32 = arith.constant 0 : i32
    %c0_i32_0 = arith.constant 0 : i32
    %c0_i32_1 = arith.constant 0 : i32
    return %c0_i32, %c0_i32_0 : i32, i32
  }
  func.func @transform_7(%arg0: i32) -> (i32, i32) {
    %c0_i32 = arith.constant 0 : i32
    %c0_i32_0 = arith.constant 0 : i32
    %c0_i32_1 = arith.constant 0 : i32
    return %c0_i32, %c0_i32_0 : i32, i32
  }
  func.func @transform_8(%arg0: i32) -> (i32, i32) {
    %c0_i32 = arith.constant 0 : i32
    %c0_i32_0 = arith.constant 0 : i32
    return %arg0, %c0_i32 : i32, i32
  }
}

</mosaic_0001>

<llo_original>
// kernel: tpu_custom_call.1
$region0: #{tpu_custom_call.1}
  #allocation0 [shape = 'u32[]', space=smem, size = 0x4, offset = 0x4, fixed_abs, tag = 'smem constant byte address 0x4 - core index']
  #allocation1 [shape = 'u32[72,128]{1,0:T(1,128)}', space=vmem, size = 0x9000, scoped, tag = 'internal scratch']
  %s0 = inlined_call_operand.hbm [shape: f32[16,256], index: 0, kind: input, shape index: {}]
  %s1 = inlined_call_operand.vmem [shape: f32[16,4], index: 1, kind: input, shape index: {}]
  %s2 = inlined_call_operand.vmem [shape: bf16[4,256], index: 2, kind: input, shape index: {}]
  %s3 = inlined_call_operand.vmem [shape: f32[1,256], index: 3, kind: input, shape index: {}]
  %s4 = inlined_call_operand.hbm [shape: bf16[2,2,256,256], index: 4, kind: input, shape index: {}]
  %s5 = inlined_call_operand.vmem [shape: f32[2,2,1,256], index: 5, kind: input, shape index: {}]
  %s6 = inlined_call_operand.hbm [shape: bf16[256,128], index: 6, kind: input, shape index: {}]
  %s7 = inlined_call_operand.vmem [shape: f32[1,128], index: 7, kind: input, shape index: {}]
  %s8 = inlined_call_operand.hbm [shape: f32[16,128], index: 8, kind: output, shape index: {}]
  %s9 = sld [smem:[#allocation0]]
  $region54: #{tpu_custom_call.1} parent=0
    _
  %s11 = ssub.s32 1, %s9
  %s12 = scalar_select 0, %s11, %s9
  $region1: #{tpu_custom_call.1} parent=0
    #allocation2 [shape = 'u8[16384]{0}', space=vmem, size = 0x4000, scoped, tag = 'input window, operand 0, single buffered']
    #allocation3 [shape = 's32[1]{0}', space=sflag, size = 0x4, scoped, tag = 'scoped memory for tpu_custom_call.1']
    #allocation4 [shape = 's32[1]{0}', space=sflag, size = 0x4, scoped, tag = 'scoped memory for tpu_custom_call.1']
    #allocation5 [shape = 'u8[524288]{0}', space=vmem, size = 0x80000, scoped, tag = 'input window, operand 4, single buffered']
    #allocation6 [shape = 's32[1]{0}', space=sflag, size = 0x4, scoped, tag = 'scoped memory for tpu_custom_call.1']
    #allocation7 [shape = 'u8[65536]{0}', space=vmem, size = 0x10000, scoped, tag = 'input window, operand 6, single buffered']
    #allocation8 [shape = 'u8[8192]{0}', space=vmem, size = 0x2000, scoped, tag = 'output window, operand 0, single buffered']
    %13 = vsyncpa [#allocation3], 0
    %14 = vsyncpa [#allocation6], 0
    %15 = vsyncpa [#allocation4], 0
    // Predicated region
    $region2: #{tpu_custom_call.1} parent=1 // pred_check
      _
    $region3: #{tpu_custom_call.1} parent=1 // pred_check_branch
      %17 = sbr.rel (0) target = $region5
    $region4: #{tpu_custom_call.1} parent=1 // pred_region
      %19 = vsyncadd [#allocation3], 0
      %s20 = sshll.u32 %s0, 4
      %s21 = int_to_ptr.hbm [resolvable:$true] %s20
      %s22 = sshll.u32 [#allocation2], 4
      %s23 = int_to_ptr.vmem [resolvable:$true] %s22
      %28 = dma.hbm_to_vmem [thread:$0]  %s21, 512, %s23, [#allocation3], 256, 256, 16
    $region5: #{tpu_custom_call.1} parent=1 // pred_fallthru
      _
    // Predicated region
    $region6: #{tpu_custom_call.1} parent=1 // pred_check
      _
    $region7: #{tpu_custom_call.1} parent=1 // pred_check_branch
      %30 = sbr.rel (0) target = $region9
    $region8: #{tpu_custom_call.1} parent=1 // pred_region
      _
    $region9: #{tpu_custom_call.1} parent=1 // pred_fallthru
      _
    // Predicated region
    $region10: #{tpu_custom_call.1} parent=1 // pred_check
      _
    $region11: #{tpu_custom_call.1} parent=1 // pred_check_branch
      %32 = sbr.rel (0) target = $region13
    $region12: #{tpu_custom_call.1} parent=1 // pred_region
      _
    $region13: #{tpu_custom_call.1} parent=1 // pred_fallthru
      _
    // Predicated region
    $region14: #{tpu_custom_call.1} parent=1 // pred_check
      _
    $region15: #{tpu_custom_call.1} parent=1 // pred_check_branch
      %34 = sbr.rel (0) target = $region17
    $region16: #{tpu_custom_call.1} parent=1 // pred_region
      _
    $region17: #{tpu_custom_call.1} parent=1 // pred_fallthru
      _
    // Predicated region
    $region18: #{tpu_custom_call.1} parent=1 // pred_check
      _
    $region19: #{tpu_custom_call.1} parent=1 // pred_check_branch
      %36 = sbr.rel (0) target = $region21
    $region20: #{tpu_custom_call.1} parent=1 // pred_region
      %38 = vsyncadd [#allocation6], 0
      %s39 = sshll.u32 %s4, 4
      %s40 = int_to_ptr.hbm [resolvable:$true] %s39
      %s41 = sshll.u32 [#allocation5], 4
      %s42 = int_to_ptr.vmem [resolvable:$true] %s41
      %47 = dma.hbm_to_vmem [thread:$0]  %s40, 16384, %s42, [#allocation6], 128, 128, 8
    $region21: #{tpu_custom_call.1} parent=1 // pred_fallthru
      _
    // Predicated region
    $region22: #{tpu_custom_call.1} parent=1 // pred_check
      _
    $region23: #{tpu_custom_call.1} parent=1 // pred_check_branch
      %49 = sbr.rel (0) target = $region25
    $region24: #{tpu_custom_call.1} parent=1 // pred_region
      _
    $region25: #{tpu_custom_call.1} parent=1 // pred_fallthru
      _
    // Predicated region
    $region26: #{tpu_custom_call.1} parent=1 // pred_check
      _
    $region27: #{tpu_custom_call.1} parent=1 // pred_check_branch
      %51 = sbr.rel (0) target = $region29
    $region28: #{tpu_custom_call.1} parent=1 // pred_region
      %53 = vsyncadd [#allocation6], 0
      %s54 = sshll.u32 %s6, 4
      %s55 = int_to_ptr.hbm [resolvable:$true] %s54
      %s56 = sshll.u32 [#allocation7], 4
      %s57 = int_to_ptr.vmem [resolvable:$true] %s56
      %62 = dma.hbm_to_vmem [thread:$0]  %s55, 2048, %s57, [#allocation6], 64, 64, 4
    $region29: #{tpu_custom_call.1} parent=1 // pred_fallthru
      _
    // Predicated region
    $region30: #{tpu_custom_call.1} parent=1 // pred_check
      _
    $region31: #{tpu_custom_call.1} parent=1 // pred_check_branch
      %64 = sbr.rel (0) target = $region33
    $region32: #{tpu_custom_call.1} parent=1 // pred_region
      _
    $region33: #{tpu_custom_call.1} parent=1 // pred_fallthru
      _
    // Predicated region
    $region34: #{tpu_custom_call.1} parent=1 // pred_check
      _
    $region35: #{tpu_custom_call.1} parent=1 // pred_check_branch
      %66 = sbr.rel (0) target = $region37
    $region36: #{tpu_custom_call.1} parent=1 // pred_region
      %68 = dma.done [#allocation3], 512
    $region37: #{tpu_custom_call.1} parent=1 // pred_fallthru
      _
    // Predicated region
    $region38: #{tpu_custom_call.1} parent=1 // pred_check
      _
    $region39: #{tpu_custom_call.1} parent=1 // pred_check_branch
      %70 = sbr.rel (0) target = $region41
    $region40: #{tpu_custom_call.1} parent=1 // pred_region
      %72 = dma.done [#allocation6], 16384
    $region41: #{tpu_custom_call.1} parent=1 // pred_fallthru
      _
    // Predicated region
    $region42: #{tpu_custom_call.1} parent=1 // pred_check
      _
    $region43: #{tpu_custom_call.1} parent=1 // pred_check_branch
      %74 = sbr.rel (0) target = $region45
    $region44: #{tpu_custom_call.1} parent=1 // pred_region
      %76 = dma.done [#allocation6], 2048
    $region45: #{tpu_custom_call.1} parent=1 // pred_fallthru
      _
    %v78 = vld [vmem:[%s1] sm:$0xff]
    %v79 = vld [vmem:[%s1 + $0x8] sm:$0xff]
    %v80 = vpack.c.bf16 %v79, %v78
    %v81 = vld [vmem:[%s2] sm:$0xf]
    %v82 = vld [vmem:[%s3] sm:$0x3]
    %v84 = vperm.slane %v82, 0
    %v85 = vperm.slane %v82, 1
    %89 = vst [vmem:[#allocation1] ss:$4 sm:$0xff] %v81
    %v90 = vld.sshfl [vmem:[#allocation1] sm:$0xff pattern:$0x73625140]
    %v91 = vld.sshfl [vmem:[#allocation1 + $0x8] sm:$0xff pattern:$0x73625140]
    %vm92 = vcmask 31744
    %v94 = vsel %vm92, %v80, 0
    %vm96 = vcmask 1041408
    %v97 = vsel %vm96, %v90, 0
    %v99 = vsel %vm96, %v91, 0
    %101 = vmatpush.bf16.msra.mxu0 0
    %102 = vmatpush.bf16.msra.mxu0 0
    %103 = vmatpush.bf16.msra.mxu0 0
    %104 = vmatpush.bf16.msra.mxu0 0
    %105 = vmatpush.bf16.msra.mxu0 0
    %106 = vmatpush.bf16.msra.mxu0 0
    %107 = vmatpush.bf16.msra.mxu0 0
    %108 = vmatpush.bf16.msra.mxu0 %v97
    %109 = vmatmul.bf16.gmra.mxu0 %v94
    %v110 = vpop.f32.mrf.mxu0
    %v111 = vadd.f32 %v84, %v110
    %v112 = vpop.f32.mrf.mxu0
    %v113 = vadd.f32 %v84, %v112
    %114 = vdwg.mxu0
    %115 = vmatpush.bf16.msra.mxu0 0
    %116 = vmatpush.bf16.msra.mxu0 0
    %117 = vmatpush.bf16.msra.mxu0 0
    %118 = vmatpush.bf16.msra.mxu0 0
    %119 = vmatpush.bf16.msra.mxu0 0
    %120 = vmatpush.bf16.msra.mxu0 0
    %121 = vmatpush.bf16.msra.mxu0 0
    %122 = vmatpush.bf16.msra.mxu0 %v99
    %123 = vmatmul.bf16.gmra.mxu0 %v94
    %v124 = vpop.f32.mrf.mxu0
    %v125 = vadd.f32 %v85, %v124
    %v126 = vpop.f32.mrf.mxu0
    %v127 = vadd.f32 %v85, %v126
    %128 = vdwg.mxu0
    %v129 = vld [vmem:[#allocation2] sm:$0xff]
    %v130 = vld [vmem:[#allocation2 + $0x8] sm:$0xff]
    %v131 = vld [vmem:[#allocation2 + $0x10] sm:$0xff]
    %v132 = vld [vmem:[#allocation2 + $0x18] sm:$0xff]
    %v133 = vmul.f32 %v129, %v111
    %v134 = vmul.f32 %v130, %v125
    %v135 = vmul.f32 %v131, %v113
    %v136 = vmul.f32 %v132, %v127
    %v137 = vpack.c.bf16 %v135, %v133
    %v138 = vpack.c.bf16 %v136, %v134
    %v139 = vld [vmem:[#allocation5] sm:$0xff]
    %v140 = vld [vmem:[#allocation5 + $0x8] sm:$0xff]
    %v141 = vld [vmem:[#allocation5 + $0x10] sm:$0xff]
    %v142 = vld [vmem:[#allocation5 + $0x18] sm:$0xff]
    %v143 = vld [vmem:[#allocation5 + $0x20] sm:$0xff]
    %v144 = vld [vmem:[#allocation5 + $0x28] sm:$0xff]
    %v145 = vld [vmem:[#allocation5 + $0x30] sm:$0xff]
    %v146 = vld [vmem:[#allocation5 + $0x38] sm:$0xff]
    %v147 = vld [vmem:[#allocation5 + $0x40] sm:$0xff]
    %v148 = vld [vmem:[#allocation5 + $0x48] sm:$0xff]
    %v149 = vld [vmem:[#allocation5 + $0x50] sm:$0xff]
    %v150 = vld [vmem:[#allocation5 + $0x58] sm:$0xff]
    %v151 = vld [vmem:[#allocation5 + $0x60] sm:$0xff]
    %v152 = vld [vmem:[#allocation5 + $0x68] sm:$0xff]
    %v153 = vld [vmem:[#allocation5 + $0x70] sm:$0xff]
    %v154 = vld [vmem:[#allocation5 + $0x78] sm:$0xff]
    %v155 = vld [vmem:[#allocation5 + $0x80] sm:$0xff]
    %v156 = vld [vmem:[#allocation5 + $0x88] sm:$0xff]
    %v157 = vld [vmem:[#allocation5 + $0x90] sm:$0xff]
    %v158 = vld [vmem:[#allocation5 + $0x98] sm:$0xff]
    %v159 = vld [vmem:[#allocation5 + $0xa0] sm:$0xff]
    %v160 = vld [vmem:[#allocation5 + $0xa8] sm:$0xff]
    %v161 = vld [vmem:[#allocation5 + $0xb0] sm:$0xff]
    %v162 = vld [vmem:[#allocation5 + $0xb8] sm:$0xff]
    %v163 = vld [vmem:[#allocation5 + $0xc0] sm:$0xff]
    %v164 = vld [vmem:[#allocation5 + $0xc8] sm:$0xff]
    %v165 = vld [vmem:[#allocation5 + $0xd0] sm:$0xff]
    %v166 = vld [vmem:[#allocation5 + $0xd8] sm:$0xff]
    %v167 = vld [vmem:[#allocation5 + $0xe0] sm:$0xff]
    %v168 = vld [vmem:[#allocation5 + $0xe8] sm:$0xff]
    %v169 = vld [vmem:[#allocation5 + $0xf0] sm:$0xff]
    %v170 = vld [vmem:[#allocation5 + $0xf8] sm:$0xff]
    %v171 = vld [vmem:[%s5] sm:$0x3]
    %v173 = vperm.slane %v171, 0
    %v174 = vperm.slane %v171, 1
    %v209 = vunpack.c.l.b16 %v139
    %v210 = vunpack.c.h.b16 %v139
    %v211 = vunpack.c.l.b16 %v140
    %v212 = vunpack.c.h.b16 %v140
    %v213 = vunpack.c.l.b16 %v141
    %v214 = vunpack.c.h.b16 %v141
    %v215 = vunpack.c.l.b16 %v142
    %v216 = vunpack.c.h.b16 %v142
    %v217 = vunpack.c.l.b16 %v143
    %v218 = vunpack.c.h.b16 %v143
    %v219 = vunpack.c.l.b16 %v144
    %v220 = vunpack.c.h.b16 %v144
    %v221 = vunpack.c.l.b16 %v145
    %v222 = vunpack.c.h.b16 %v145
    %v223 = vunpack.c.l.b16 %v146
    %v224 = vunpack.c.h.b16 %v146
    %v225 = vunpack.c.l.b16 %v147
    %v226 = vunpack.c.h.b16 %v147
    %v227 = vunpack.c.l.b16 %v148
    %v228 = vunpack.c.h.b16 %v148
    %v229 = vunpack.c.l.b16 %v149
    %v230 = vunpack.c.h.b16 %v149
    %v231 = vunpack.c.l.b16 %v150
    %v232 = vunpack.c.h.b16 %v150
    %v233 = vunpack.c.l.b16 %v151
    %v234 = vunpack.c.h.b16 %v151
    %v235 = vunpack.c.l.b16 %v152
    %v236 = vunpack.c.h.b16 %v152
    %v237 = vunpack.c.l.b16 %v153
    %v238 = vunpack.c.h.b16 %v153
    %v239 = vunpack.c.l.b16 %v154
    %v240 = vunpack.c.h.b16 %v154
    %v241 = vunpack.c.l.b16 %v155
    %v242 = vunpack.c.h.b16 %v155
    %v243 = vunpack.c.l.b16 %v156
    %v244 = vunpack.c.h.b16 %v156
    %v245 = vunpack.c.l.b16 %v157
    %v246 = vunpack.c.h.b16 %v157
    %v247 = vunpack.c.l.b16 %v158
    %v248 = vunpack.c.h.b16 %v158
    %v249 = vunpack.c.l.b16 %v159
    %v250 = vunpack.c.h.b16 %v159
    %v251 = vunpack.c.l.b16 %v160
    %v252 = vunpack.c.h.b16 %v160
    %v253 = vunpack.c.l.b16 %v161
    %v254 = vunpack.c.h.b16 %v161
    %v255 = vunpack.c.l.b16 %v162
    %v256 = vunpack.c.h.b16 %v162
    %v257 = vunpack.c.l.b16 %v163
    %v258 = vunpack.c.h.b16 %v163
    %v259 = vunpack.c.l.b16 %v164
    %v260 = vunpack.c.h.b16 %v164
    %v261 = vunpack.c.l.b16 %v165
    %v262 = vunpack.c.h.b16 %v165
    %v263 = vunpack.c.l.b16 %v166
    %v264 = vunpack.c.h.b16 %v166
    %v265 = vunpack.c.l.b16 %v167
    %v266 = vunpack.c.h.b16 %v167
    %v267 = vunpack.c.l.b16 %v168
    %v268 = vunpack.c.h.b16 %v168
    %v269 = vunpack.c.l.b16 %v169
    %v270 = vunpack.c.h.b16 %v169
    %v271 = vunpack.c.l.b16 %v170
    %v272 = vunpack.c.h.b16 %v170
    %v273 = vpack.c.b16 %v211, %v209
    %v274 = vpack.c.b16 %v212, %v210
    %v275 = vpack.c.b16 %v215, %v213
    %v276 = vpack.c.b16 %v216, %v214
    %v277 = vpack.c.b16 %v219, %v217
    %v278 = vpack.c.b16 %v220, %v218
    %v279 = vpack.c.b16 %v223, %v221
    %v280 = vpack.c.b16 %v224, %v222
    %v281 = vpack.c.b16 %v227, %v225
    %v282 = vpack.c.b16 %v228, %v226
    %v283 = vpack.c.b16 %v231, %v229
    %v284 = vpack.c.b16 %v232, %v230
    %v285 = vpack.c.b16 %v235, %v233
    %v286 = vpack.c.b16 %v236, %v234
    %v287 = vpack.c.b16 %v239, %v237
    %v288 = vpack.c.b16 %v240, %v238
    %v289 = vpack.c.b16 %v243, %v241
    %v290 = vpack.c.b16 %v244, %v242
    %v291 = vpack.c.b16 %v247, %v245
    %v292 = vpack.c.b16 %v248, %v246
    %v293 = vpack.c.b16 %v251, %v249
    %v294 = vpack.c.b16 %v252, %v250
    %v295 = vpack.c.b16 %v255, %v253
    %v296 = vpack.c.b16 %v256, %v254
    %v297 = vpack.c.b16 %v259, %v257
    %v298 = vpack.c.b16 %v260, %v258
    %v299 = vpack.c.b16 %v263, %v261
    %v300 = vpack.c.b16 %v264, %v262
    %v301 = vpack.c.b16 %v267, %v265
    %v302 = vpack.c.b16 %v268, %v266
    %v303 = vpack.c.b16 %v271, %v269
    %v304 = vpack.c.b16 %v272, %v270
    %337 = vmatpush.bf16.msra.mxu0 %v287
    %338 = vmatpush.bf16.msra.mxu0 %v285
    %339 = vmatpush.bf16.msra.mxu0 %v283
    %340 = vmatpush.bf16.msra.mxu0 %v281
    %341 = vmatpush.bf16.msra.mxu0 %v279
    %342 = vmatpush.bf16.msra.mxu0 %v277
    %343 = vmatpush.bf16.msra.mxu0 %v275
    %344 = vmatpush.bf16.msra.mxu0 %v273
    %345 = vmatmul.bf16.gmra.mxu0 %v137
    %v346 = vpop.f32.mrf.mxu0
    %v347 = vadd.f32 %v173, %v346
    %v348 = vpop.f32.mrf.mxu0
    %v349 = vadd.f32 %v173, %v348
    %350 = vdwg.mxu0
    %351 = vmatpush.bf16.msra.mxu0 %v303
    %352 = vmatpush.bf16.msra.mxu0 %v301
    %353 = vmatpush.bf16.msra.mxu0 %v299
    %354 = vmatpush.bf16.msra.mxu0 %v297
    %355 = vmatpush.bf16.msra.mxu0 %v295
    %356 = vmatpush.bf16.msra.mxu0 %v293
    %357 = vmatpush.bf16.msra.mxu0 %v291
    %358 = vmatpush.bf16.msra.mxu0 %v289
    %359 = vmatmul.bf16.gmra.mxu0 %v138
    %v360 = vpop.f32.mrf.mxu0
    %v361 = vadd.f32 %v347, %v360
    %v362 = vpop.f32.mrf.mxu0
    %v363 = vadd.f32 %v349, %v362
    %364 = vdwg.mxu0
    %365 = vmatpush.bf16.msra.mxu0 %v288
    %366 = vmatpush.bf16.msra.mxu0 %v286
    %367 = vmatpush.bf16.msra.mxu0 %v284
    %368 = vmatpush.bf16.msra.mxu0 %v282
    %369 = vmatpush.bf16.msra.mxu0 %v280
    %370 = vmatpush.bf16.msra.mxu0 %v278
    %371 = vmatpush.bf16.msra.mxu0 %v276
    %372 = vmatpush.bf16.msra.mxu0 %v274
    %373 = vmatmul.bf16.gmra.mxu0 %v137
    %v374 = vpop.f32.mrf.mxu0
    %v375 = vadd.f32 %v174, %v374
    %v376 = vpop.f32.mrf.mxu0
    %v377 = vadd.f32 %v174, %v376
    %378 = vdwg.mxu0
    %379 = vmatpush.bf16.msra.mxu0 %v304
    %380 = vmatpush.bf16.msra.mxu0 %v302
    %381 = vmatpush.bf16.msra.mxu0 %v300
    %382 = vmatpush.bf16.msra.mxu0 %v298
    %383 = vmatpush.bf16.msra.mxu0 %v296
    %384 = vmatpush.bf16.msra.mxu0 %v294
    %385 = vmatpush.bf16.msra.mxu0 %v292
    %386 = vmatpush.bf16.msra.mxu0 %v290
    %387 = vmatmul.bf16.gmra.mxu0 %v138
    %v388 = vpop.f32.mrf.mxu0
    %v389 = vadd.f32 %v375, %v388
    %v390 = vpop.f32.mrf.mxu0
    %v391 = vadd.f32 %v377, %v390
    %392 = vdwg.mxu0
    %v393 = vmax.f32 %v361, 0.0
    %v394 = vmax.f32 %v389, 0.0
    %v395 = vmax.f32 %v363, 0.0
    %v396 = vmax.f32 %v391, 0.0
    %v397 = vpack.c.bf16 %v395, %v393
    %v398 = vpack.c.bf16 %v396, %v394
    %s399 = scalar_lea.vmem [#allocation5], 256
    %v400 = vld [vmem:[%s399] sm:$0xff]
    %v401 = vld [vmem:[%s399 + $0x8] sm:$0xff]
    %v402 = vld [vmem:[%s399 + $0x10] sm:$0xff]
    %v403 = vld [vmem:[%s399 + $0x18] sm:$0xff]
    %v404 = vld [vmem:[%s399 + $0x20] sm:$0xff]
    %v405 = vld [vmem:[%s399 + $0x28] sm:$0xff]
    %v406 = vld [vmem:[%s399 + $0x30] sm:$0xff]
    %v407 = vld [vmem:[%s399 + $0x38] sm:$0xff]
    %v408 = vld [vmem:[%s399 + $0x40] sm:$0xff]
    %v409 = vld [vmem:[%s399 + $0x48] sm:$0xff]
    %v410 = vld [vmem:[%s399 + $0x50] sm:$0xff]
    %v411 = vld [vmem:[%s399 + $0x58] sm:$0xff]
    %v412 = vld [vmem:[%s399 + $0x60] sm:$0xff]
    %v413 = vld [vmem:[%s399 + $0x68] sm:$0xff]
    %v414 = vld [vmem:[%s399 + $0x70] sm:$0xff]
    %v415 = vld [vmem:[%s399 + $0x78] sm:$0xff]
    %v416 = vld [vmem:[%s399 + $0x80] sm:$0xff]
    %v417 = vld [vmem:[%s399 + $0x88] sm:$0xff]
    %v418 = vld [vmem:[%s399 + $0x90] sm:$0xff]
    %v419 = vld [vmem:[%s399 + $0x98] sm:$0xff]
    %v420 = vld [vmem:[%s399 + $0xa0] sm:$0xff]
    %v421 = vld [vmem:[%s399 + $0xa8] sm:$0xff]
    %v422 = vld [vmem:[%s399 + $0xb0] sm:$0xff]
    %v423 = vld [vmem:[%s399 + $0xb8] sm:$0xff]
    %v424 = vld [vmem:[%s399 + $0xc0] sm:$0xff]
    %v425 = vld [vmem:[%s399 + $0xc8] sm:$0xff]
    %v426 = vld [vmem:[%s399 + $0xd0] sm:$0xff]
    %v427 = vld [vmem:[%s399 + $0xd8] sm:$0xff]
    %v428 = vld [vmem:[%s399 + $0xe0] sm:$0xff]
    %v429 = vld [vmem:[%s399 + $0xe8] sm:$0xff]
    %v430 = vld [vmem:[%s399 + $0xf0] sm:$0xff]
    %v431 = vld [vmem:[%s399 + $0xf8] sm:$0xff]
    %s432 = scalar_lea.vmem %s5, 2
    %v433 = vld [vmem:[%s432] sm:$0x3]
    %v435 = vperm.slane %v433, 0
    %v436 = vperm.slane %v433, 1
    %v471 = vunpack.c.l.b16 %v400
    %v472 = vunpack.c.h.b16 %v400
    %v473 = vunpack.c.l.b16 %v401
    %v474 = vunpack.c.h.b16 %v401
    %v475 = vunpack.c.l.b16 %v402
    %v476 = vunpack.c.h.b16 %v402
    %v477 = vunpack.c.l.b16 %v403
    %v478 = vunpack.c.h.b16 %v403
    %v479 = vunpack.c.l.b16 %v404
    %v480 = vunpack.c.h.b16 %v404
    %v481 = vunpack.c.l.b16 %v405
    %v482 = vunpack.c.h.b16 %v405
    %v483 = vunpack.c.l.b16 %v406
    %v484 = vunpack.c.h.b16 %v406
    %v485 = vunpack.c.l.b16 %v407
    %v486 = vunpack.c.h.b16 %v407
    %v487 = vunpack.c.l.b16 %v408
    %v488 = vunpack.c.h.b16 %v408
    %v489 = vunpack.c.l.b16 %v409
    %v490 = vunpack.c.h.b16 %v409
    %v491 = vunpack.c.l.b16 %v410
    %v492 = vunpack.c.h.b16 %v410
    %v493 = vunpack.c.l.b16 %v411
    %v494 = vunpack.c.h.b16 %v411
    %v495 = vunpack.c.l.b16 %v412
    %v496 = vunpack.c.h.b16 %v412
    %v497 = vunpack.c.l.b16 %v413
    %v498 = vunpack.c.h.b16 %v413
    %v499 = vunpack.c.l.b16 %v414
    %v500 = vunpack.c.h.b16 %v414
    %v501 = vunpack.c.l.b16 %v415
    %v502 = vunpack.c.h.b16 %v415
    %v503 = vunpack.c.l.b16 %v416
    %v504 = vunpack.c.h.b16 %v416
    %v505 = vunpack.c.l.b16 %v417
    %v506 = vunpack.c.h.b16 %v417
    %v507 = vunpack.c.l.b16 %v418
    %v508 = vunpack.c.h.b16 %v418
    %v509 = vunpack.c.l.b16 %v419
    %v510 = vunpack.c.h.b16 %v419
    %v511 = vunpack.c.l.b16 %v420
    %v512 = vunpack.c.h.b16 %v420
    %v513 = vunpack.c.l.b16 %v421
    %v514 = vunpack.c.h.b16 %v421
    %v515 = vunpack.c.l.b16 %v422
    %v516 = vunpack.c.h.b16 %v422
    %v517 = vunpack.c.l.b16 %v423
    %v518 = vunpack.c.h.b16 %v423
    %v519 = vunpack.c.l.b16 %v424
    %v520 = vunpack.c.h.b16 %v424
    %v521 = vunpack.c.l.b16 %v425
    %v522 = vunpack.c.h.b16 %v425
    %v523 = vunpack.c.l.b16 %v426
    %v524 = vunpack.c.h.b16 %v426
    %v525 = vunpack.c.l.b16 %v427
    %v526 = vunpack.c.h.b16 %v427
    %v527 = vunpack.c.l.b16 %v428
    %v528 = vunpack.c.h.b16 %v428
    %v529 = vunpack.c.l.b16 %v429
    %v530 = vunpack.c.h.b16 %v429
    %v531 = vunpack.c.l.b16 %v430
    %v532 = vunpack.c.h.b16 %v430
    %v533 = vunpack.c.l.b16 %v431
    %v534 = vunpack.c.h.b16 %v431
    %v535 = vpack.c.b16 %v473, %v471
    %v536 = vpack.c.b16 %v474, %v472
    %v537 = vpack.c.b16 %v477, %v475
    %v538 = vpack.c.b16 %v478, %v476
    %v539 = vpack.c.b16 %v481, %v479
    %v540 = vpack.c.b16 %v482, %v480
    %v541 = vpack.c.b16 %v485, %v483
    %v542 = vpack.c.b16 %v486, %v484
    %v543 = vpack.c.b16 %v489, %v487
    %v544 = vpack.c.b16 %v490, %v488
    %v545 = vpack.c.b16 %v493, %v491
    %v546 = vpack.c.b16 %v494, %v492
    %v547 = vpack.c.b16 %v497, %v495
    %v548 = vpack.c.b16 %v498, %v496
    %v549 = vpack.c.b16 %v501, %v499
    %v550 = vpack.c.b16 %v502, %v500
    %v551 = vpack.c.b16 %v505, %v503
    %v552 = vpack.c.b16 %v506, %v504
    %v553 = vpack.c.b16 %v509, %v507
    %v554 = vpack.c.b16 %v510, %v508
    %v555 = vpack.c.b16 %v513, %v511
    %v556 = vpack.c.b16 %v514, %v512
    %v557 = vpack.c.b16 %v517, %v515
    %v558 = vpack.c.b16 %v518, %v516
    %v559 = vpack.c.b16 %v521, %v519
    %v560 = vpack.c.b16 %v522, %v520
    %v561 = vpack.c.b16 %v525, %v523
    %v562 = vpack.c.b16 %v526, %v524
    %v563 = vpack.c.b16 %v529, %v527
    %v564 = vpack.c.b16 %v530, %v528
    %v565 = vpack.c.b16 %v533, %v531
    %v566 = vpack.c.b16 %v534, %v532
    %599 = vmatpush.bf16.msra.mxu0 %v549
    %600 = vmatpush.bf16.msra.mxu0 %v547
    %601 = vmatpush.bf16.msra.mxu0 %v545
    %602 = vmatpush.bf16.msra.mxu0 %v543
    %603 = vmatpush.bf16.msra.mxu0 %v541
    %604 = vmatpush.bf16.msra.mxu0 %v539
    %605 = vmatpush.bf16.msra.mxu0 %v537
    %606 = vmatpush.bf16.msra.mxu0 %v535
    %607 = vmatmul.bf16.gmra.mxu0 %v397
    %v608 = vpop.f32.mrf.mxu0
    %v609 = vadd.f32 %v435, %v608
    %v610 = vpop.f32.mrf.mxu0
    %v611 = vadd.f32 %v435, %v610
    %612 = vdwg.mxu0
    %613 = vmatpush.bf16.msra.mxu0 %v565
    %614 = vmatpush.bf16.msra.mxu0 %v563
    %615 = vmatpush.bf16.msra.mxu0 %v561
    %616 = vmatpush.bf16.msra.mxu0 %v559
    %617 = vmatpush.bf16.msra.mxu0 %v557
    %618 = vmatpush.bf16.msra.mxu0 %v555
    %619 = vmatpush.bf16.msra.mxu0 %v553
    %620 = vmatpush.bf16.msra.mxu0 %v551
    %621 = vmatmul.bf16.gmra.mxu0 %v398
    %v622 = vpop.f32.mrf.mxu0
    %v623 = vadd.f32 %v609, %v622
    %v624 = vpop.f32.mrf.mxu0
    %v625 = vadd.f32 %v611, %v624
    %626 = vdwg.mxu0
    %627 = vmatpush.bf16.msra.mxu0 %v550
    %628 = vmatpush.bf16.msra.mxu0 %v548
    %629 = vmatpush.bf16.msra.mxu0 %v546
    %630 = vmatpush.bf16.msra.mxu0 %v544
    %631 = vmatpush.bf16.msra.mxu0 %v542
    %632 = vmatpush.bf16.msra.mxu0 %v540
    %633 = vmatpush.bf16.msra.mxu0 %v538
    %634 = vmatpush.bf16.msra.mxu0 %v536
    %635 = vmatmul.bf16.gmra.mxu0 %v397
    %v636 = vpop.f32.mrf.mxu0
    %v637 = vadd.f32 %v436, %v636
    %v638 = vpop.f32.mrf.mxu0
    %v639 = vadd.f32 %v436, %v638
    %640 = vdwg.mxu0
    %641 = vmatpush.bf16.msra.mxu0 %v566
    %642 = vmatpush.bf16.msra.mxu0 %v564
    %643 = vmatpush.bf16.msra.mxu0 %v562
    %644 = vmatpush.bf16.msra.mxu0 %v560
    %645 = vmatpush.bf16.msra.mxu0 %v558
    %646 = vmatpush.bf16.msra.mxu0 %v556
    %647 = vmatpush.bf16.msra.mxu0 %v554
    %648 = vmatpush.bf16.msra.mxu0 %v552
    %649 = vmatmul.bf16.gmra.mxu0 %v398
    %v650 = vpop.f32.mrf.mxu0
    %v651 = vadd.f32 %v637, %v650
    %v652 = vpop.f32.mrf.mxu0
    %v653 = vadd.f32 %v639, %v652
    %654 = vdwg.mxu0
    %v655 = vadd.f32 %v623, %v133
    %v656 = vadd.f32 %v651, %v134
    %v657 = vadd.f32 %v625, %v135
    %v658 = vadd.f32 %v653, %v136
    %v659 = vmax.f32 %v655, 0.0
    %v660 = vmax.f32 %v656, 0.0
    %v661 = vmax.f32 %v657, 0.0
    %v662 = vmax.f32 %v658, 0.0
    %v663 = vpack.c.bf16 %v661, %v659
    %v664 = vpack.c.bf16 %v662, %v660
    %s665 = scalar_lea.vmem [#allocation5], 512
    %v666 = vld [vmem:[%s665] sm:$0xff]
    %v667 = vld [vmem:[%s665 + $0x8] sm:$0xff]
    %v668 = vld [vmem:[%s665 + $0x10] sm:$0xff]
    %v669 = vld [vmem:[%s665 + $0x18] sm:$0xff]
    %v670 = vld [vmem:[%s665 + $0x20] sm:$0xff]
    %v671 = vld [vmem:[%s665 + $0x28] sm:$0xff]
    %v672 = vld [vmem:[%s665 + $0x30] sm:$0xff]
    %v673 = vld [vmem:[%s665 + $0x38] sm:$0xff]
    %v674 = vld [vmem:[%s665 + $0x40] sm:$0xff]
    %v675 = vld [vmem:[%s665 + $0x48] sm:$0xff]
    %v676 = vld [vmem:[%s665 + $0x50] sm:$0xff]
    %v677 = vld [vmem:[%s665 + $0x58] sm:$0xff]
    %v678 = vld [vmem:[%s665 + $0x60] sm:$0xff]
    %v679 = vld [vmem:[%s665 + $0x68] sm:$0xff]
    %v680 = vld [vmem:[%s665 + $0x70] sm:$0xff]
    %v681 = vld [vmem:[%s665 + $0x78] sm:$0xff]
    %v682 = vld [vmem:[%s665 + $0x80] sm:$0xff]
    %v683 = vld [vmem:[%s665 + $0x88] sm:$0xff]
    %v684 = vld [vmem:[%s665 + $0x90] sm:$0xff]
    %v685 = vld [vmem:[%s665 + $0x98] sm:$0xff]
    %v686 = vld [vmem:[%s665 + $0xa0] sm:$0xff]
    %v687 = vld [vmem:[%s665 + $0xa8] sm:$0xff]
    %v688 = vld [vmem:[%s665 + $0xb0] sm:$0xff]
    %v689 = vld [vmem:[%s665 + $0xb8] sm:$0xff]
    %v690 = vld [vmem:[%s665 + $0xc0] sm:$0xff]
    %v691 = vld [vmem:[%s665 + $0xc8] sm:$0xff]
    %v692 = vld [vmem:[%s665 + $0xd0] sm:$0xff]
    %v693 = vld [vmem:[%s665 + $0xd8] sm:$0xff]
    %v694 = vld [vmem:[%s665 + $0xe0] sm:$0xff]
    %v695 = vld [vmem:[%s665 + $0xe8] sm:$0xff]
    %v696 = vld [vmem:[%s665 + $0xf0] sm:$0xff]
    %v697 = vld [vmem:[%s665 + $0xf8] sm:$0xff]
    %s698 = scalar_lea.vmem %s5, 4
    %v699 = vld [vmem:[%s698] sm:$0x3]
    %v701 = vperm.slane %v699, 0
    %v702 = vperm.slane %v699, 1
    %v737 = vunpack.c.l.b16 %v666
    %v738 = vunpack.c.h.b16 %v666
    %v739 = vunpack.c.l.b16 %v667
    %v740 = vunpack.c.h.b16 %v667
    %v741 = vunpack.c.l.b16 %v668
    %v742 = vunpack.c.h.b16 %v668
    %v743 = vunpack.c.l.b16 %v669
    %v744 = vunpack.c.h.b16 %v669
    %v745 = vunpack.c.l.b16 %v670
    %v746 = vunpack.c.h.b16 %v670
    %v747 = vunpack.c.l.b16 %v671
    %v748 = vunpack.c.h.b16 %v671
    %v749 = vunpack.c.l.b16 %v672
    %v750 = vunpack.c.h.b16 %v672
    %v751 = vunpack.c.l.b16 %v673
    %v752 = vunpack.c.h.b16 %v673
    %v753 = vunpack.c.l.b16 %v674
    %v754 = vunpack.c.h.b16 %v674
    %v755 = vunpack.c.l.b16 %v675
    %v756 = vunpack.c.h.b16 %v675
    %v757 = vunpack.c.l.b16 %v676
    %v758 = vunpack.c.h.b16 %v676
    %v759 = vunpack.c.l.b16 %v677
    %v760 = vunpack.c.h.b16 %v677
    %v761 = vunpack.c.l.b16 %v678
    %v762 = vunpack.c.h.b16 %v678
    %v763 = vunpack.c.l.b16 %v679
    %v764 = vunpack.c.h.b16 %v679
    %v765 = vunpack.c.l.b16 %v680
    %v766 = vunpack.c.h.b16 %v680
    %v767 = vunpack.c.l.b16 %v681
    %v768 = vunpack.c.h.b16 %v681
    %v769 = vunpack.c.l.b16 %v682
    %v770 = vunpack.c.h.b16 %v682
    %v771 = vunpack.c.l.b16 %v683
    %v772 = vunpack.c.h.b16 %v683
    %v773 = vunpack.c.l.b16 %v684
    %v774 = vunpack.c.h.b16 %v684
    %v775 = vunpack.c.l.b16 %v685
    %v776 = vunpack.c.h.b16 %v685
    %v777 = vunpack.c.l.b16 %v686
    %v778 = vunpack.c.h.b16 %v686
    %v779 = vunpack.c.l.b16 %v687
    %v780 = vunpack.c.h.b16 %v687
    %v781 = vunpack.c.l.b16 %v688
    %v782 = vunpack.c.h.b16 %v688
    %v783 = vunpack.c.l.b16 %v689
    %v784 = vunpack.c.h.b16 %v689
    %v785 = vunpack.c.l.b16 %v690
    %v786 = vunpack.c.h.b16 %v690
    %v787 = vunpack.c.l.b16 %v691
    %v788 = vunpack.c.h.b16 %v691
    %v789 = vunpack.c.l.b16 %v692
    %v790 = vunpack.c.h.b16 %v692
    %v791 = vunpack.c.l.b16 %v693
    %v792 = vunpack.c.h.b16 %v693
    %v793 = vunpack.c.l.b16 %v694
    %v794 = vunpack.c.h.b16 %v694
    %v795 = vunpack.c.l.b16 %v695
    %v796 = vunpack.c.h.b16 %v695
    %v797 = vunpack.c.l.b16 %v696
    %v798 = vunpack.c.h.b16 %v696
    %v799 = vunpack.c.l.b16 %v697
    %v800 = vunpack.c.h.b16 %v697
    %v801 = vpack.c.b16 %v739, %v737
    %v802 = vpack.c.b16 %v740, %v738
    %v803 = vpack.c.b16 %v743, %v741
    %v804 = vpack.c.b16 %v744, %v742
    %v805 = vpack.c.b16 %v747, %v745
    %v806 = vpack.c.b16 %v748, %v746
    %v807 = vpack.c.b16 %v751, %v749
    %v808 = vpack.c.b16 %v752, %v750
    %v809 = vpack.c.b16 %v755, %v753
    %v810 = vpack.c.b16 %v756, %v754
    %v811 = vpack.c.b16 %v759, %v757
    %v812 = vpack.c.b16 %v760, %v758
    %v813 = vpack.c.b16 %v763, %v761
    %v814 = vpack.c.b16 %v764, %v762
    %v815 = vpack.c.b16 %v767, %v765
    %v816 = vpack.c.b16 %v768, %v766
    %v817 = vpack.c.b16 %v771, %v769
    %v818 = vpack.c.b16 %v772, %v770
    %v819 = vpack.c.b16 %v775, %v773
    %v820 = vpack.c.b16 %v776, %v774
    %v821 = vpack.c.b16 %v779, %v777
    %v822 = vpack.c.b16 %v780, %v778
    %v823 = vpack.c.b16 %v783, %v781
    %v824 = vpack.c.b16 %v784, %v782
    %v825 = vpack.c.b16 %v787, %v785
    %v826 = vpack.c.b16 %v788, %v786
    %v827 = vpack.c.b16 %v791, %v789
    %v828 = vpack.c.b16 %v792, %v790
    %v829 = vpack.c.b16 %v795, %v793
    %v830 = vpack.c.b16 %v796, %v794
    %v831 = vpack.c.b16 %v799, %v797
    %v832 = vpack.c.b16 %v800, %v798
    %865 = vmatpush.bf16.msra.mxu0 %v815
    %866 = vmatpush.bf16.msra.mxu0 %v813
    %867 = vmatpush.bf16.msra.mxu0 %v811
    %868 = vmatpush.bf16.msra.mxu0 %v809
    %869 = vmatpush.bf16.msra.mxu0 %v807
    %870 = vmatpush.bf16.msra.mxu0 %v805
    %871 = vmatpush.bf16.msra.mxu0 %v803
    %872 = vmatpush.bf16.msra.mxu0 %v801
    %873 = vmatmul.bf16.gmra.mxu0 %v663
    %v874 = vpop.f32.mrf.mxu0
    %v875 = vadd.f32 %v701, %v874
    %v876 = vpop.f32.mrf.mxu0
    %v877 = vadd.f32 %v701, %v876
    %878 = vdwg.mxu0
    %879 = vmatpush.bf16.msra.mxu0 %v831
    %880 = vmatpush.bf16.msra.mxu0 %v829
    %881 = vmatpush.bf16.msra.mxu0 %v827
    %882 = vmatpush.bf16.msra.mxu0 %v825
    %883 = vmatpush.bf16.msra.mxu0 %v823
    %884 = vmatpush.bf16.msra.mxu0 %v821
    %885 = vmatpush.bf16.msra.mxu0 %v819
    %886 = vmatpush.bf16.msra.mxu0 %v817
    %887 = vmatmul.bf16.gmra.mxu0 %v664
    %v888 = vpop.f32.mrf.mxu0
    %v889 = vadd.f32 %v875, %v888
    %v890 = vpop.f32.mrf.mxu0
    %v891 = vadd.f32 %v877, %v890
    %892 = vdwg.mxu0
    %893 = vmatpush.bf16.msra.mxu0 %v816
    %894 = vmatpush.bf16.msra.mxu0 %v814
    %895 = vmatpush.bf16.msra.mxu0 %v812
    %896 = vmatpush.bf16.msra.mxu0 %v810
    %897 = vmatpush.bf16.msra.mxu0 %v808
    %898 = vmatpush.bf16.msra.mxu0 %v806
    %899 = vmatpush.bf16.msra.mxu0 %v804
    %900 = vmatpush.bf16.msra.mxu0 %v802
    %901 = vmatmul.bf16.gmra.mxu0 %v663
    %v902 = vpop.f32.mrf.mxu0
    %v903 = vadd.f32 %v702, %v902
    %v904 = vpop.f32.mrf.mxu0
    %v905 = vadd.f32 %v702, %v904
    %906 = vdwg.mxu0
    %907 = vmatpush.bf16.msra.mxu0 %v832
    %908 = vmatpush.bf16.msra.mxu0 %v830
    %909 = vmatpush.bf16.msra.mxu0 %v828
    %910 = vmatpush.bf16.msra.mxu0 %v826
    %911 = vmatpush.bf16.msra.mxu0 %v824
    %912 = vmatpush.bf16.msra.mxu0 %v822
    %913 = vmatpush.bf16.msra.mxu0 %v820
    %914 = vmatpush.bf16.msra.mxu0 %v818
    %915 = vmatmul.bf16.gmra.mxu0 %v664
    %v916 = vpop.f32.mrf.mxu0
    %v917 = vadd.f32 %v903, %v916
    %v918 = vpop.f32.mrf.mxu0
    %v919 = vadd.f32 %v905, %v918
    %920 = vdwg.mxu0
    %v921 = vmax.f32 %v889, 0.0
    %v922 = vmax.f32 %v917, 0.0
    %v923 = vmax.f32 %v891, 0.0
    %v924 = vmax.f32 %v919, 0.0
    %v925 = vpack.c.bf16 %v923, %v921
    %v926 = vpack.c.bf16 %v924, %v922
    %s927 = scalar_lea.vmem [#allocation5], 768
    %v928 = vld [vmem:[%s927] sm:$0xff]
    %v929 = vld [vmem:[%s927 + $0x8] sm:$0xff]
    %v930 = vld [vmem:[%s927 + $0x10] sm:$0xff]
    %v931 = vld [vmem:[%s927 + $0x18] sm:$0xff]
    %v932 = vld [vmem:[%s927 + $0x20] sm:$0xff]
    %v933 = vld [vmem:[%s927 + $0x28] sm:$0xff]
    %v934 = vld [vmem:[%s927 + $0x30] sm:$0xff]
    %v935 = vld [vmem:[%s927 + $0x38] sm:$0xff]
    %v936 = vld [vmem:[%s927 + $0x40] sm:$0xff]
    %v937 = vld [vmem:[%s927 + $0x48] sm:$0xff]
    %v938 = vld [vmem:[%s927 + $0x50] sm:$0xff]
    %v939 = vld [vmem:[%s927 + $0x58] sm:$0xff]
    %v940 = vld [vmem:[%s927 + $0x60] sm:$0xff]
    %v941 = vld [vmem:[%s927 + $0x68] sm:$0xff]
    %v942 = vld [vmem:[%s927 + $0x70] sm:$0xff]
    %v943 = vld [vmem:[%s927 + $0x78] sm:$0xff]
    %v944 = vld [vmem:[%s927 + $0x80] sm:$0xff]
    %v945 = vld [vmem:[%s927 + $0x88] sm:$0xff]
    %v946 = vld [vmem:[%s927 + $0x90] sm:$0xff]
    %v947 = vld [vmem:[%s927 + $0x98] sm:$0xff]
    %v948 = vld [vmem:[%s927 + $0xa0] sm:$0xff]
    %v949 = vld [vmem:[%s927 + $0xa8] sm:$0xff]
    %v950 = vld [vmem:[%s927 + $0xb0] sm:$0xff]
    %v951 = vld [vmem:[%s927 + $0xb8] sm:$0xff]
    %v952 = vld [vmem:[%s927 + $0xc0] sm:$0xff]
    %v953 = vld [vmem:[%s927 + $0xc8] sm:$0xff]
    %v954 = vld [vmem:[%s927 + $0xd0] sm:$0xff]
    %v955 = vld [vmem:[%s927 + $0xd8] sm:$0xff]
    %v956 = vld [vmem:[%s927 + $0xe0] sm:$0xff]
    %v957 = vld [vmem:[%s927 + $0xe8] sm:$0xff]
    %v958 = vld [vmem:[%s927 + $0xf0] sm:$0xff]
    %v959 = vld [vmem:[%s927 + $0xf8] sm:$0xff]
    %s960 = scalar_lea.vmem %s5, 6
    %v961 = vld [vmem:[%s960] sm:$0x3]
    %v963 = vperm.slane %v961, 0
    %v964 = vperm.slane %v961, 1
    %v999 = vunpack.c.l.b16 %v928
    %v1000 = vunpack.c.h.b16 %v928
    %v1001 = vunpack.c.l.b16 %v929
    %v1002 = vunpack.c.h.b16 %v929
    %v1003 = vunpack.c.l.b16 %v930
    %v1004 = vunpack.c.h.b16 %v930
    %v1005 = vunpack.c.l.b16 %v931
    %v1006 = vunpack.c.h.b16 %v931
    %v1007 = vunpack.c.l.b16 %v932
    %v1008 = vunpack.c.h.b16 %v932
    %v1009 = vunpack.c.l.b16 %v933
    %v1010 = vunpack.c.h.b16 %v933
    %v1011 = vunpack.c.l.b16 %v934
    %v1012 = vunpack.c.h.b16 %v934
    %v1013 = vunpack.c.l.b16 %v935
    %v1014 = vunpack.c.h.b16 %v935
    %v1015 = vunpack.c.l.b16 %v936
    %v1016 = vunpack.c.h.b16 %v936
    %v1017 = vunpack.c.l.b16 %v937
    %v1018 = vunpack.c.h.b16 %v937
    %v1019 = vunpack.c.l.b16 %v938
    %v1020 = vunpack.c.h.b16 %v938
    %v1021 = vunpack.c.l.b16 %v939
    %v1022 = vunpack.c.h.b16 %v939
    %v1023 = vunpack.c.l.b16 %v940
    %v1024 = vunpack.c.h.b16 %v940
    %v1025 = vunpack.c.l.b16 %v941
    %v1026 = vunpack.c.h.b16 %v941
    %v1027 = vunpack.c.l.b16 %v942
    %v1028 = vunpack.c.h.b16 %v942
    %v1029 = vunpack.c.l.b16 %v943
    %v1030 = vunpack.c.h.b16 %v943
    %v1031 = vunpack.c.l.b16 %v944
    %v1032 = vunpack.c.h.b16 %v944
    %v1033 = vunpack.c.l.b16 %v945
    %v1034 = vunpack.c.h.b16 %v945
    %v1035 = vunpack.c.l.b16 %v946
    %v1036 = vunpack.c.h.b16 %v946
    %v1037 = vunpack.c.l.b16 %v947
    %v1038 = vunpack.c.h.b16 %v947
    %v1039 = vunpack.c.l.b16 %v948
    %v1040 = vunpack.c.h.b16 %v948
    %v1041 = vunpack.c.l.b16 %v949
    %v1042 = vunpack.c.h.b16 %v949
    %v1043 = vunpack.c.l.b16 %v950
    %v1044 = vunpack.c.h.b16 %v950
    %v1045 = vunpack.c.l.b16 %v951
    %v1046 = vunpack.c.h.b16 %v951
    %v1047 = vunpack.c.l.b16 %v952
    %v1048 = vunpack.c.h.b16 %v952
    %v1049 = vunpack.c.l.b16 %v953
    %v1050 = vunpack.c.h.b16 %v953
    %v1051 = vunpack.c.l.b16 %v954
    %v1052 = vunpack.c.h.b16 %v954
    %v1053 = vunpack.c.l.b16 %v955
    %v1054 = vunpack.c.h.b16 %v955
    %v1055 = vunpack.c.l.b16 %v956
    %v1056 = vunpack.c.h.b16 %v956
    %v1057 = vunpack.c.l.b16 %v957
    %v1058 = vunpack.c.h.b16 %v957
    %v1059 = vunpack.c.l.b16 %v958
    %v1060 = vunpack.c.h.b16 %v958
    %v1061 = vunpack.c.l.b16 %v959
    %v1062 = vunpack.c.h.b16 %v959
    %v1063 = vpack.c.b16 %v1001, %v999
    %v1064 = vpack.c.b16 %v1002, %v1000
    %v1065 = vpack.c.b16 %v1005, %v1003
    %v1066 = vpack.c.b16 %v1006, %v1004
    %v1067 = vpack.c.b16 %v1009, %v1007
    %v1068 = vpack.c.b16 %v1010, %v1008
    %v1069 = vpack.c.b16 %v1013, %v1011
    %v1070 = vpack.c.b16 %v1014, %v1012
    %v1071 = vpack.c.b16 %v1017, %v1015
    %v1072 = vpack.c.b16 %v1018, %v1016
    %v1073 = vpack.c.b16 %v1021, %v1019
    %v1074 = vpack.c.b16 %v1022, %v1020
    %v1075 = vpack.c.b16 %v1025, %v1023
    %v1076 = vpack.c.b16 %v1026, %v1024
    %v1077 = vpack.c.b16 %v1029, %v1027
    %v1078 = vpack.c.b16 %v1030, %v1028
    %v1079 = vpack.c.b16 %v1033, %v1031
    %v1080 = vpack.c.b16 %v1034, %v1032
    %v1081 = vpack.c.b16 %v1037, %v1035
    %v1082 = vpack.c.b16 %v1038, %v1036
    %v1083 = vpack.c.b16 %v1041, %v1039
    %v1084 = vpack.c.b16 %v1042, %v1040
    %v1085 = vpack.c.b16 %v1045, %v1043
    %v1086 = vpack.c.b16 %v1046, %v1044
    %v1087 = vpack.c.b16 %v1049, %v1047
    %v1088 = vpack.c.b16 %v1050, %v1048
    %v1089 = vpack.c.b16 %v1053, %v1051
    %v1090 = vpack.c.b16 %v1054, %v1052
    %v1091 = vpack.c.b16 %v1057, %v1055
    %v1092 = vpack.c.b16 %v1058, %v1056
    %v1093 = vpack.c.b16 %v1061, %v1059
    %v1094 = vpack.c.b16 %v1062, %v1060
    %1127 = vmatpush.bf16.msra.mxu0 %v1077
    %1128 = vmatpush.bf16.msra.mxu0 %v1075
    %1129 = vmatpush.bf16.msra.mxu0 %v1073
    %1130 = vmatpush.bf16.msra.mxu0 %v1071
    %1131 = vmatpush.bf16.msra.mxu0 %v1069
    %1132 = vmatpush.bf16.msra.mxu0 %v1067
    %1133 = vmatpush.bf16.msra.mxu0 %v1065
    %1134 = vmatpush.bf16.msra.mxu0 %v1063
    %1135 = vmatmul.bf16.gmra.mxu0 %v925
    %v1136 = vpop.f32.mrf.mxu0
    %v1137 = vadd.f32 %v963, %v1136
    %v1138 = vpop.f32.mrf.mxu0
    %v1139 = vadd.f32 %v963, %v1138
    %1140 = vdwg.mxu0
    %1141 = vmatpush.bf16.msra.mxu0 %v1093
    %1142 = vmatpush.bf16.msra.mxu0 %v1091
    %1143 = vmatpush.bf16.msra.mxu0 %v1089
    %1144 = vmatpush.bf16.msra.mxu0 %v1087
    %1145 = vmatpush.bf16.msra.mxu0 %v1085
    %1146 = vmatpush.bf16.msra.mxu0 %v1083
    %1147 = vmatpush.bf16.msra.mxu0 %v1081
    %1148 = vmatpush.bf16.msra.mxu0 %v1079
    %1149 = vmatmul.bf16.gmra.mxu0 %v926
    %v1150 = vpop.f32.mrf.mxu0
    %v1151 = vadd.f32 %v1137, %v1150
    %v1152 = vpop.f32.mrf.mxu0
    %v1153 = vadd.f32 %v1139, %v1152
    %1154 = vdwg.mxu0
    %1155 = vmatpush.bf16.msra.mxu0 %v1078
    %1156 = vmatpush.bf16.msra.mxu0 %v1076
    %1157 = vmatpush.bf16.msra.mxu0 %v1074
    %1158 = vmatpush.bf16.msra.mxu0 %v1072
    %1159 = vmatpush.bf16.msra.mxu0 %v1070
    %1160 = vmatpush.bf16.msra.mxu0 %v1068
    %1161 = vmatpush.bf16.msra.mxu0 %v1066
    %1162 = vmatpush.bf16.msra.mxu0 %v1064
    %1163 = vmatmul.bf16.gmra.mxu0 %v925
    %v1164 = vpop.f32.mrf.mxu0
    %v1165 = vadd.f32 %v964, %v1164
    %v1166 = vpop.f32.mrf.mxu0
    %v1167 = vadd.f32 %v964, %v1166
    %1168 = vdwg.mxu0
    %1169 = vmatpush.bf16.msra.mxu0 %v1094
    %1170 = vmatpush.bf16.msra.mxu0 %v1092
    %1171 = vmatpush.bf16.msra.mxu0 %v1090
    %1172 = vmatpush.bf16.msra.mxu0 %v1088
    %1173 = vmatpush.bf16.msra.mxu0 %v1086
    %1174 = vmatpush.bf16.msra.mxu0 %v1084
    %1175 = vmatpush.bf16.msra.mxu0 %v1082
    %1176 = vmatpush.bf16.msra.mxu0 %v1080
    %1177 = vmatmul.bf16.gmra.mxu0 %v926
    %v1178 = vpop.f32.mrf.mxu0
    %v1179 = vadd.f32 %v1165, %v1178
    %v1180 = vpop.f32.mrf.mxu0
    %v1181 = vadd.f32 %v1167, %v1180
    %1182 = vdwg.mxu0
    %v1183 = vadd.f32 %v1151, %v659
    %v1184 = vadd.f32 %v1179, %v660
    %v1185 = vadd.f32 %v1153, %v661
    %v1186 = vadd.f32 %v1181, %v662
    %v1187 = vmax.f32 %v1183, 0.0
    %v1188 = vmax.f32 %v1184, 0.0
    %v1189 = vmax.f32 %v1185, 0.0
    %v1190 = vmax.f32 %v1186, 0.0
    %v1191 = vpack.c.bf16 %v1189, %v1187
    %v1192 = vpack.c.bf16 %v1190, %v1188
    %v1193 = vld [vmem:[#allocation7] sm:$0xf]
    %v1194 = vld [vmem:[#allocation7 + $0x4] sm:$0xf]
    %v1195 = vld [vmem:[#allocation7 + $0x8] sm:$0xf]
    %v1196 = vld [vmem:[#allocation7 + $0xc] sm:$0xf]
    %v1197 = vld [vmem:[#allocation7 + $0x10] sm:$0xf]
    %v1198 = vld [vmem:[#allocation7 + $0x14] sm:$0xf]
    %v1199 = vld [vmem:[#allocation7 + $0x18] sm:$0xf]
    %v1200 = vld [vmem:[#allocation7 + $0x1c] sm:$0xf]
    %v1201 = vld [vmem:[#allocation7 + $0x20] sm:$0xf]
    %v1202 = vld [vmem:[#allocation7 + $0x24] sm:$0xf]
    %v1203 = vld [vmem:[#allocation7 + $0x28] sm:$0xf]
    %v1204 = vld [vmem:[#allocation7 + $0x2c] sm:$0xf]
    %v1205 = vld [vmem:[#allocation7 + $0x30] sm:$0xf]
    %v1206 = vld [vmem:[#allocation7 + $0x34] sm:$0xf]
    %v1207 = vld [vmem:[#allocation7 + $0x38] sm:$0xf]
    %v1208 = vld [vmem:[#allocation7 + $0x3c] sm:$0xf]
    %v1209 = vld [vmem:[#allocation7 + $0x40] sm:$0xf]
    %v1210 = vld [vmem:[#allocation7 + $0x44] sm:$0xf]
    %v1211 = vld [vmem:[#allocation7 + $0x48] sm:$0xf]
    %v1212 = vld [vmem:[#allocation7 + $0x4c] sm:$0xf]
    %v1213 = vld [vmem:[#allocation7 + $0x50] sm:$0xf]
    %v1214 = vld [vmem:[#allocation7 + $0x54] sm:$0xf]
    %v1215 = vld [vmem:[#allocation7 + $0x58] sm:$0xf]
    %v1216 = vld [vmem:[#allocation7 + $0x5c] sm:$0xf]
    %v1217 = vld [vmem:[#allocation7 + $0x60] sm:$0xf]
    %v1218 = vld [vmem:[#allocation7 + $0x64] sm:$0xf]
    %v1219 = vld [vmem:[#allocation7 + $0x68] sm:$0xf]
    %v1220 = vld [vmem:[#allocation7 + $0x6c] sm:$0xf]
    %v1221 = vld [vmem:[#allocation7 + $0x70] sm:$0xf]
    %v1222 = vld [vmem:[#allocation7 + $0x74] sm:$0xf]
    %v1223 = vld [vmem:[#allocation7 + $0x78] sm:$0xf]
    %v1224 = vld [vmem:[#allocation7 + $0x7c] sm:$0xf]
    %v1225 = vld [vmem:[%s7] sm:$0x1]
    %v1227 = vperm.slane %v1225, 0
    %v1261 = vunpack.c.l.b16 %v1193
    %v1262 = vunpack.c.l.b16 %v1194
    %v1263 = vunpack.c.l.b16 %v1195
    %v1264 = vunpack.c.l.b16 %v1196
    %v1265 = vunpack.c.l.b16 %v1197
    %v1266 = vunpack.c.l.b16 %v1198
    %v1267 = vunpack.c.l.b16 %v1199
    %v1268 = vunpack.c.l.b16 %v1200
    %v1269 = vunpack.c.l.b16 %v1201
    %v1270 = vunpack.c.l.b16 %v1202
    %v1271 = vunpack.c.l.b16 %v1203
    %v1272 = vunpack.c.l.b16 %v1204
    %v1273 = vunpack.c.l.b16 %v1205
    %v1274 = vunpack.c.l.b16 %v1206
    %v1275 = vunpack.c.l.b16 %v1207
    %v1276 = vunpack.c.l.b16 %v1208
    %v1277 = vunpack.c.l.b16 %v1209
    %v1278 = vunpack.c.l.b16 %v1210
    %v1279 = vunpack.c.l.b16 %v1211
    %v1280 = vunpack.c.l.b16 %v1212
    %v1281 = vunpack.c.l.b16 %v1213
    %v1282 = vunpack.c.l.b16 %v1214
    %v1283 = vunpack.c.l.b16 %v1215
    %v1284 = vunpack.c.l.b16 %v1216
    %v1285 = vunpack.c.l.b16 %v1217
    %v1286 = vunpack.c.l.b16 %v1218
    %v1287 = vunpack.c.l.b16 %v1219
    %v1288 = vunpack.c.l.b16 %v1220
    %v1289 = vunpack.c.l.b16 %v1221
    %v1290 = vunpack.c.l.b16 %v1222
    %v1291 = vunpack.c.l.b16 %v1223
    %v1292 = vunpack.c.l.b16 %v1224
    %v1293 = vpack.c.b16 %v1262, %v1261
    %v1294 = vpack.c.b16 %v1264, %v1263
    %v1295 = vpack.c.b16 %v1266, %v1265
    %v1296 = vpack.c.b16 %v1268, %v1267
    %v1297 = vpack.c.b16 %v1270, %v1269
    %v1298 = vpack.c.b16 %v1272, %v1271
    %v1299 = vpack.c.b16 %v1274, %v1273
    %v1300 = vpack.c.b16 %v1276, %v1275
    %v1301 = vpack.c.b16 %v1278, %v1277
    %v1302 = vpack.c.b16 %v1280, %v1279
    %v1303 = vpack.c.b16 %v1282, %v1281
    %v1304 = vpack.c.b16 %v1284, %v1283
    %v1305 = vpack.c.b16 %v1286, %v1285
    %v1306 = vpack.c.b16 %v1288, %v1287
    %v1307 = vpack.c.b16 %v1290, %v1289
    %v1308 = vpack.c.b16 %v1292, %v1291
    %1325 = vmatpush.bf16.msra.mxu0 %v1300
    %1326 = vmatpush.bf16.msra.mxu0 %v1299
    %1327 = vmatpush.bf16.msra.mxu0 %v1298
    %1328 = vmatpush.bf16.msra.mxu0 %v1297
    %1329 = vmatpush.bf16.msra.mxu0 %v1296
    %1330 = vmatpush.bf16.msra.mxu0 %v1295
    %1331 = vmatpush.bf16.msra.mxu0 %v1294
    %1332 = vmatpush.bf16.msra.mxu0 %v1293
    %1333 = vmatmul.bf16.gmra.mxu0 %v1191
    %v1334 = vpop.f32.mrf.mxu0
    %v1335 = vadd.f32 %v1227, %v1334
    %v1336 = vpop.f32.mrf.mxu0
    %v1337 = vadd.f32 %v1227, %v1336
    %1338 = vdwg.mxu0
    %1339 = vmatpush.bf16.msra.mxu0 %v1308
    %1340 = vmatpush.bf16.msra.mxu0 %v1307
    %1341 = vmatpush.bf16.msra.mxu0 %v1306
    %1342 = vmatpush.bf16.msra.mxu0 %v1305
    %1343 = vmatpush.bf16.msra.mxu0 %v1304
    %1344 = vmatpush.bf16.msra.mxu0 %v1303
    %1345 = vmatpush.bf16.msra.mxu0 %v1302
    %1346 = vmatpush.bf16.msra.mxu0 %v1301
    %1347 = vmatmul.bf16.gmra.mxu0 %v1192
    %v1348 = vpop.f32.mrf.mxu0
    %v1349 = vadd.f32 %v1335, %v1348
    %v1350 = vpop.f32.mrf.mxu0
    %v1351 = vadd.f32 %v1337, %v1350
    %1352 = vdwg.mxu0
    %1353 = vst [vmem:[#allocation8] sm:$0xff] %v1349
    %1354 = vst [vmem:[#allocation8 + $0x8] sm:$0xff] %v1351
    // Predicated region
    $region46: #{tpu_custom_call.1} parent=1 // pred_check
      _
    $region47: #{tpu_custom_call.1} parent=1 // pred_check_branch
      %1356 = sbr.rel (0) target = $region49
    $region48: #{tpu_custom_call.1} parent=1 // pred_region
      %1358 = vsyncadd [#allocation4], 0
      %s1359 = sshll.u32 [#allocation8], 4
      %s1360 = int_to_ptr.vmem [resolvable:$true] %s1359
      %s1361 = sshll.u32 %s8, 4
      %s1362 = int_to_ptr.hbm [resolvable:$true] %s1361
      %1367 = dma.vmem_to_hbm [thread:$0]  %s1360, 256, %s1362, [#allocation4], 128, 128, 8
    $region49: #{tpu_custom_call.1} parent=1 // pred_fallthru
      _
    // Predicated region
    $region50: #{tpu_custom_call.1} parent=1 // pred_check
      _
    $region51: #{tpu_custom_call.1} parent=1 // pred_check_branch
      %1369 = sbr.rel (0) target = $region53
    $region52: #{tpu_custom_call.1} parent=1 // pred_region
      %1371 = dma.done [#allocation4], 256
    $region53: #{tpu_custom_call.1} parent=1 // pred_fallthru
      _
    %1372 = vsyncpa [#allocation3], 1
    %1373 = vsyncpa [#allocation6], 1
    %1374 = vsyncpa [#allocation4], 1

</llo_original>
